<compile_context>
chip_gen: v6e
topology: v6e:2x2x1
jax: 0.10.0
libtpu: 0.0.40
codegen_flags: <defaults>
</compile_context>

<pallas_src>
import jax
import jax.numpy as jnp
from jax.experimental import pallas as pl
from jax.experimental.pallas import tpu as pltpu


# ----------------------------- Pallas kernels --------------------------------

def _sums_kernel(p_ref, t_ref, m_ref, a00_ref, a01_ref, a11_ref, b0_ref, b1_ref):
    """Per-batch masked normal-equation sums, accumulated over the H-tile axis."""
    @pl.when(pl.program_id(1) == 0)
    def _init():
        a00_ref[...] = jnp.zeros_like(a00_ref)
        a01_ref[...] = jnp.zeros_like(a01_ref)
        a11_ref[...] = jnp.zeros_like(a11_ref)
        b0_ref[...] = jnp.zeros_like(b0_ref)
        b1_ref[...] = jnp.zeros_like(b1_ref)

    p = p_ref[0].astype(jnp.float32)      # (TILE_H, W)
    t = t_ref[0].astype(jnp.float32)
    m = m_ref[0].astype(jnp.float32)
    mp = m * p
    a00_ref[0] += jnp.sum(mp * p, keepdims=True)   # sum(mask * pred * pred)
    a01_ref[0] += jnp.sum(mp, keepdims=True)       # sum(mask * pred)
    a11_ref[0] += jnp.sum(m, keepdims=True)        # sum(mask)
    b0_ref[0] += jnp.sum(mp * t, keepdims=True)    # sum(mask * pred * target)
    b1_ref[0] += jnp.sum(m * t, keepdims=True)     # sum(mask * target)


def _l1_kernel(scale_ref, shift_ref, p_ref, t_ref, m_ref, num_ref):
    """Per-batch masked |scale*pred + shift - target| sum, accumulated over H tiles."""
    @pl.when(pl.program_id(1) == 0)
    def _init():
        num_ref[...] = jnp.zeros_like(num_ref)

    p = p_ref[0].astype(jnp.float32)      # (TILE_H, W)
    t = t_ref[0].astype(jnp.float32)
    m = m_ref[0].astype(jnp.float32)
    s = scale_ref[0]                      # (1, 1) -> broadcasts against (TILE_H, W)
    c = shift_ref[0]
    num_ref[0] += jnp.sum(m * jnp.abs(s * p + c - t), keepdims=True)


# ------------------------------- wrapper --------------------------------------

def _squeeze_channel(x):
    if x.ndim == 4:
        if x.shape[1] != 1:
            raise ValueError(f"expected channel dim of size 1, got {x.shape}")
        return x[:, 0]
    if x.ndim == 3:
        return x
    raise ValueError(f"expected (B,1,H,W) or (B,H,W), got {x.shape}")


def _choose_tile_h(H, W, itemsize, budget_bytes=6 * 1024 * 1024):
    # Keep 3 inputs x 2 pipeline buffers x (TILE_H, W) blocks under `budget_bytes`
    # so even v5e's ~16 MiB default scoped VMEM has headroom for f32 temporaries.
    rows = max(1, budget_bytes // (6 * W * itemsize))
    if rows >= H:
        return H, H                        # whole slab in one (full-dim) tile
    tile_h = max(8, (rows // 8) * 8)       # sublane-aligned tile
    h_pad = ((H + tile_h - 1) // tile_h) * tile_h
    return tile_h, h_pad


def scale_and_shift_invariant_loss(prediction, target, mask,
                                   interpolate=True, return_interpolated=False):
    if prediction.shape[-1] != target.shape[-1] and interpolate:
        # TODO(synk): bilinear resize of `prediction` to target's spatial shape with
        # align_corners=True is not implemented; spatial shapes must already match.
        raise NotImplementedError("bilinear interpolation branch not implemented")
    intr_input = prediction

    p = _squeeze_channel(prediction)
    t = _squeeze_channel(target)
    m = _squeeze_channel(mask)
    assert p.shape == t.shape == m.shape, (p.shape, t.shape, m.shape)

    # boolean mask -> numeric 0/1 weights (kept narrow: prediction's float dtype)
    m_dtype = p.dtype if jnp.issubdtype(p.dtype, jnp.floating) else jnp.float32
    m = m.astype(m_dtype)

    B, H, W = p.shape
    itemsize = max(jnp.dtype(p.dtype).itemsize,
                   jnp.dtype(t.dtype).itemsize,
                   jnp.dtype(m.dtype).itemsize)
    tile_h, h_pad = _choose_tile_h(H, W, itemsize)
    if h_pad != H:
        # zero-mask padding rows contribute nothing to any of the masked sums
        pad = ((0, 0), (0, h_pad - H), (0, 0))
        p = jnp.pad(p, pad)
        t = jnp.pad(t, pad)
        m = jnp.pad(m, pad)

    grid = (B, h_pad // tile_h)
    img_spec = pl.BlockSpec((1, tile_h, W), lambda b, h: (b, h, 0))
    scalar_spec = pl.BlockSpec((1, 1, 1), lambda b, h: (b, 0, 0))
    scalar_shape = jax.ShapeDtypeStruct((B, 1, 1), jnp.float32)
    cparams = pltpu.CompilerParams(
        dimension_semantics=("parallel", "arbitrary"))

    # ---- pass 1: per-batch normal-equation sums ----
    a00, a01, a11, b0, b1 = pl.pallas_call(
        _sums_kernel,
        out_shape=(scalar_shape,) * 5,
        grid=grid,
        in_specs=[img_spec, img_spec, img_spec],
        out_specs=(scalar_spec,) * 5,
        compiler_params=cparams,
    )(p, t, m)

    a00 = a00[:, 0, 0]
    a01 = a01[:, 0, 0]
    a11 = a11[:, 0, 0]
    b0 = b0[:, 0, 0]
    b1 = b1[:, 0, 0]

    # ---- tiny per-batch 2x2 solve (matches compute_scale_and_shift) ----
    det = a00 * a11 - a01 * a01
    valid = det > 0
    safe_det = jnp.where(valid, det, 1.0)
    scale = jnp.where(valid, (a11 * b0 - a01 * b1) / safe_det, 0.0)
    shift = jnp.where(valid, (-a01 * b0 + a00 * b1) / safe_det, 0.0)

    # ---- pass 2: masked L1 numerator ----
    scale3 = scale.reshape(B, 1, 1).astype(jnp.float32)
    shift3 = shift.reshape(B, 1, 1).astype(jnp.float32)
    abs_sum = pl.pallas_call(
        _l1_kernel,
        out_shape=scalar_shape,
        grid=grid,
        in_specs=[scalar_spec, scalar_spec, img_spec, img_spec, img_spec],
        out_specs=scalar_spec,
        compiler_params=cparams,
    )(scale3, shift3, p, t, m)

    # F.l1_loss(scaled_prediction[mask], target[mask]) == sum(|.|*mask) / sum(mask)
    loss = jnp.sum(abs_sum[:, 0, 0]) / jnp.sum(a11)

    if return_interpolated:
        return loss, intr_input
    return loss


# --------------------------- pure-JAX reference --------------------------------

def ssi_loss_reference(prediction, target, mask):
    """Mirror of the PyTorch ScaleAndShiftInvariantLoss forward (shapes (B,H,W))."""
    p = prediction.astype(jnp.float32)
    t = target.astype(jnp.float32)
    m = mask.astype(jnp.float32)
    a00 = jnp.sum(m * p * p, axis=(1, 2))
    a01 = jnp.sum(m * p, axis=(1, 2))
    a11 = jnp.sum(m, axis=(1, 2))
    b0 = jnp.sum(m * p * t, axis=(1, 2))
    b1 = jnp.sum(m * t, axis=(1, 2))
    det = a00 * a11 - a01 * a01
    valid = det > 0
    safe_det = jnp.where(valid, det, 1.0)
    scale = jnp.where(valid, (a11 * b0 - a01 * b1) / safe_det, 0.0)
    shift = jnp.where(valid, (-a01 * b0 + a00 * b1) / safe_det, 0.0)
    sp = scale[:, None, None] * p + shift[:, None, None]
    return jnp.sum(m * jnp.abs(sp - t)) / jnp.sum(m)


if __name__ == "__main__":
    key = jax.random.PRNGKey(0)
    k1, k2, k3 = jax.random.split(key, 3)
    B, C, H, W = 2, 1, 16, 16
    prediction = jax.random.uniform(k1, (B, C, H, W), jnp.float32) + 0.1
    target = jax.random.uniform(k2, (B, C, H, W), jnp.float32) + 0.1
    mask = jax.random.bernoulli(k3, 0.8, (B, C, H, W))   # boolean mask, as in PyTorch

    loss = scale_and_shift_invariant_loss(prediction, target, mask)
    loss = jax.block_until_ready(loss)

    ref = ssi_loss_reference(prediction[:, 0], target[:, 0], mask[:, 0])
    assert jnp.allclose(loss, ref, atol=1e-5, rtol=1e-5), (loss, ref)

    print("KERNEL_OK")
</pallas_src>

<mosaic_0001>
module attributes {stable_mosaic.version = 11 : i64} {
  func.func @_sums_kernel(%arg0: i32, %arg1: i32, %arg2: memref<1x16x16xf32, #tpu.memory_space<vmem>>, %arg3: memref<1x16x16xf32, #tpu.memory_space<vmem>>, %arg4: memref<1x16x16xf32, #tpu.memory_space<vmem>>, %arg5: memref<1x1x1xf32, #tpu.memory_space<vmem>>, %arg6: memref<1x1x1xf32, #tpu.memory_space<vmem>>, %arg7: memref<1x1x1xf32, #tpu.memory_space<vmem>>, %arg8: memref<1x1x1xf32, #tpu.memory_space<vmem>>, %arg9: memref<1x1x1xf32, #tpu.memory_space<vmem>>) attributes {dimension_semantics = [#tpu.dimension_semantics<parallel>, #tpu.dimension_semantics<arbitrary>], iteration_bounds = array<i64: 2, 1>, scalar_prefetch = 0 : i64, scratch_operands = 0 : i64, tpu.core_type = #tpu.core_type<tc>, window_params = [{transform_indices = @transform_0, window_bounds = array<i64: 1, 16, 16>}, {transform_indices = @transform_1, window_bounds = array<i64: 1, 16, 16>}, {transform_indices = @transform_2, window_bounds = array<i64: 1, 16, 16>}, {transform_indices = @transform_3, window_bounds = array<i64: 1, 1, 1>}, {transform_indices = @transform_4, window_bounds = array<i64: 1, 1, 1>}, {transform_indices = @transform_5, window_bounds = array<i64: 1, 1, 1>}, {transform_indices = @transform_6, window_bounds = array<i64: 1, 1, 1>}, {transform_indices = @transform_7, window_bounds = array<i64: 1, 1, 1>}]} {
    %c0_i32 = arith.constant 0 : i32
    %0 = arith.cmpi eq, %arg1, %c0_i32 : i32
    %1 = arith.extui %0 : i1 to i32
    %c0_i32_0 = arith.constant 0 : i32
    %2 = arith.cmpi ne, %1, %c0_i32_0 : i32
    scf.if %2 {
      %cst_43 = arith.constant 0.000000e+00 : f32
      %68 = vector.broadcast %cst_43 : f32 to vector<1x1x1xf32>
      %c0_44 = arith.constant 0 : index
      %c0_45 = arith.constant 0 : index
      %c0_46 = arith.constant 0 : index
      %69 = vector.load %arg5[%c0_44, %c0_45, %c0_46] : memref<1x1x1xf32, #tpu.memory_space<vmem>>, vector<1x1x1xf32>
      tpu.vector_store %arg5[%c0_44, %c0_45, %c0_46], %68 {strides = array<i32>} : memref<1x1x1xf32, #tpu.memory_space<vmem>>, vector<1x1x1xf32>,
      %cst_47 = arith.constant 0.000000e+00 : f32
      %70 = vector.broadcast %cst_47 : f32 to vector<1x1x1xf32>
      %c0_48 = arith.constant 0 : index
      %c0_49 = arith.constant 0 : index
      %c0_50 = arith.constant 0 : index
      %71 = vector.load %arg6[%c0_48, %c0_49, %c0_50] : memref<1x1x1xf32, #tpu.memory_space<vmem>>, vector<1x1x1xf32>
      tpu.vector_store %arg6[%c0_48, %c0_49, %c0_50], %70 {strides = array<i32>} : memref<1x1x1xf32, #tpu.memory_space<vmem>>, vector<1x1x1xf32>,
      %cst_51 = arith.constant 0.000000e+00 : f32
      %72 = vector.broadcast %cst_51 : f32 to vector<1x1x1xf32>
      %c0_52 = arith.constant 0 : index
      %c0_53 = arith.constant 0 : index
      %c0_54 = arith.constant 0 : index
      %73 = vector.load %arg7[%c0_52, %c0_53, %c0_54] : memref<1x1x1xf32, #tpu.memory_space<vmem>>, vector<1x1x1xf32>
      tpu.vector_store %arg7[%c0_52, %c0_53, %c0_54], %72 {strides = array<i32>} : memref<1x1x1xf32, #tpu.memory_space<vmem>>, vector<1x1x1xf32>,
      %cst_55 = arith.constant 0.000000e+00 : f32
      %74 = vector.broadcast %cst_55 : f32 to vector<1x1x1xf32>
      %c0_56 = arith.constant 0 : index
      %c0_57 = arith.constant 0 : index
      %c0_58 = arith.constant 0 : index
      %75 = vector.load %arg8[%c0_56, %c0_57, %c0_58] : memref<1x1x1xf32, #tpu.memory_space<vmem>>, vector<1x1x1xf32>
      tpu.vector_store %arg8[%c0_56, %c0_57, %c0_58], %74 {strides = array<i32>} : memref<1x1x1xf32, #tpu.memory_space<vmem>>, vector<1x1x1xf32>,
      %cst_59 = arith.constant 0.000000e+00 : f32
      %76 = vector.broadcast %cst_59 : f32 to vector<1x1x1xf32>
      %c0_60 = arith.constant 0 : index
      %c0_61 = arith.constant 0 : index
      %c0_62 = arith.constant 0 : index
      %77 = vector.load %arg9[%c0_60, %c0_61, %c0_62] : memref<1x1x1xf32, #tpu.memory_space<vmem>>, vector<1x1x1xf32>
      tpu.vector_store %arg9[%c0_60, %c0_61, %c0_62], %76 {strides = array<i32>} : memref<1x1x1xf32, #tpu.memory_space<vmem>>, vector<1x1x1xf32>,
    } else {
    }
    %c0 = arith.constant 0 : index
    %c0_1 = arith.constant 0 : index
    %c0_2 = arith.constant 0 : index
    %3 = vector.load %arg2[%c0, %c0_1, %c0_2] : memref<1x16x16xf32, #tpu.memory_space<vmem>>, vector<1x16x16xf32>
    %4 = vector.shape_cast %3 : vector<1x16x16xf32> to vector<16x16xf32>
    %c0_3 = arith.constant 0 : index
    %c0_4 = arith.constant 0 : index
    %c0_5 = arith.constant 0 : index
    %5 = vector.load %arg3[%c0_3, %c0_4, %c0_5] : memref<1x16x16xf32, #tpu.memory_space<vmem>>, vector<1x16x16xf32>
    %6 = vector.shape_cast %5 : vector<1x16x16xf32> to vector<16x16xf32>
    %c0_6 = arith.constant 0 : index
    %c0_7 = arith.constant 0 : index
    %c0_8 = arith.constant 0 : index
    %7 = vector.load %arg4[%c0_6, %c0_7, %c0_8] : memref<1x16x16xf32, #tpu.memory_space<vmem>>, vector<1x16x16xf32>
    %8 = vector.shape_cast %7 : vector<1x16x16xf32> to vector<16x16xf32>
    %9 = arith.mulf %8, %4 : vector<16x16xf32>
    %c0_9 = arith.constant 0 : index
    %c0_10 = arith.constant 0 : index
    %c0_11 = arith.constant 0 : index
    %10 = vector.load %arg5[%c0_9, %c0_10, %c0_11] : memref<1x1x1xf32, #tpu.memory_space<vmem>>, vector<1x1x1xf32>
    %11 = vector.shape_cast %10 : vector<1x1x1xf32> to vector<1x1xf32>
    %12 = arith.mulf %9, %4 : vector<16x16xf32>
    %13 = vector.shape_cast %12 : vector<16x16xf32> to vector<1x16x16xf32>
    %cst = arith.constant dense<0.000000e+00> : vector<1xf32>
    %14 = vector.multi_reduction <add>, %13, %cst [1, 2] : vector<1x16x16xf32> to vector<1xf32>
    %15 = vector.shape_cast %14 : vector<1xf32> to vector<1x1x1xf32>
    %16 = vector.extract %15[0, 0, 0] : f32 from vector<1x1x1xf32>
    %17 = vector.broadcast %16 : f32 to vector<1x1xf32>
    %18 = arith.addf %11, %17 : vector<1x1xf32>
    %c0_12 = arith.constant 0 : index
    %c0_13 = arith.constant 0 : index
    %c0_14 = arith.constant 0 : index
    %19 = vector.load %arg5[%c0_12, %c0_13, %c0_14] : memref<1x1x1xf32, #tpu.memory_space<vmem>>, vector<1x1x1xf32>
    %20 = vector.shape_cast %19 : vector<1x1x1xf32> to vector<1x1xf32>
    %21 = vector.shape_cast %18 : vector<1x1xf32> to vector<1x1x1xf32>
    tpu.vector_store %arg5[%c0_12, %c0_13, %c0_14], %21 {strides = array<i32>} : memref<1x1x1xf32, #tpu.memory_space<vmem>>, vector<1x1x1xf32>,
    %c0_15 = arith.constant 0 : index
    %c0_16 = arith.constant 0 : index
    %c0_17 = arith.constant 0 : index
    %22 = vector.load %arg6[%c0_15, %c0_16, %c0_17] : memref<1x1x1xf32, #tpu.memory_space<vmem>>, vector<1x1x1xf32>
    %23 = vector.shape_cast %22 : vector<1x1x1xf32> to vector<1x1xf32>
    %24 = vector.shape_cast %9 : vector<16x16xf32> to vector<1x16x16xf32>
    %cst_18 = arith.constant dense<0.000000e+00> : vector<1xf32>
    %25 = vector.multi_reduction <add>, %24, %cst_18 [1, 2] : vector<1x16x16xf32> to vector<1xf32>
    %26 = vector.shape_cast %25 : vector<1xf32> to vector<1x1x1xf32>
    %27 = vector.extract %26[0, 0, 0] : f32 from vector<1x1x1xf32>
    %28 = vector.broadcast %27 : f32 to vector<1x1xf32>
    %29 = arith.addf %23, %28 : vector<1x1xf32>
    %c0_19 = arith.constant 0 : index
    %c0_20 = arith.constant 0 : index
    %c0_21 = arith.constant 0 : index
    %30 = vector.load %arg6[%c0_19, %c0_20, %c0_21] : memref<1x1x1xf32, #tpu.memory_space<vmem>>, vector<1x1x1xf32>
    %31 = vector.shape_cast %30 : vector<1x1x1xf32> to vector<1x1xf32>
    %32 = vector.shape_cast %29 : vector<1x1xf32> to vector<1x1x1xf32>
    tpu.vector_store %arg6[%c0_19, %c0_20, %c0_21], %32 {strides = array<i32>} : memref<1x1x1xf32, #tpu.memory_space<vmem>>, vector<1x1x1xf32>,
    %c0_22 = arith.constant 0 : index
    %c0_23 = arith.constant 0 : index
    %c0_24 = arith.constant 0 : index
    %33 = vector.load %arg7[%c0_22, %c0_23, %c0_24] : memref<1x1x1xf32, #tpu.memory_space<vmem>>, vector<1x1x1xf32>
    %34 = vector.shape_cast %33 : vector<1x1x1xf32> to vector<1x1xf32>
    %35 = vector.shape_cast %8 : vector<16x16xf32> to vector<1x16x16xf32>
    %cst_25 = arith.constant dense<0.000000e+00> : vector<1xf32>
    %36 = vector.multi_reduction <add>, %35, %cst_25 [1, 2] : vector<1x16x16xf32> to vector<1xf32>
    %37 = vector.shape_cast %36 : vector<1xf32> to vector<1x1x1xf32>
    %38 = vector.extract %37[0, 0, 0] : f32 from vector<1x1x1xf32>
    %39 = vector.broadcast %38 : f32 to vector<1x1xf32>
    %40 = arith.addf %34, %39 : vector<1x1xf32>
    %c0_26 = arith.constant 0 : index
    %c0_27 = arith.constant 0 : index
    %c0_28 = arith.constant 0 : index
    %41 = vector.load %arg7[%c0_26, %c0_27, %c0_28] : memref<1x1x1xf32, #tpu.memory_space<vmem>>, vector<1x1x1xf32>
    %42 = vector.shape_cast %41 : vector<1x1x1xf32> to vector<1x1xf32>
    %43 = vector.shape_cast %40 : vector<1x1xf32> to vector<1x1x1xf32>
    tpu.vector_store %arg7[%c0_26, %c0_27, %c0_28], %43 {strides = array<i32>} : memref<1x1x1xf32, #tpu.memory_space<vmem>>, vector<1x1x1xf32>,
    %c0_29 = arith.constant 0 : index
    %c0_30 = arith.constant 0 : index
    %c0_31 = arith.constant 0 : index
    %44 = vector.load %arg8[%c0_29, %c0_30, %c0_31] : memref<1x1x1xf32, #tpu.memory_space<vmem>>, vector<1x1x1xf32>
    %45 = vector.shape_cast %44 : vector<1x1x1xf32> to vector<1x1xf32>
    %46 = arith.mulf %9, %6 : vector<16x16xf32>
    %47 = vector.shape_cast %46 : vector<16x16xf32> to vector<1x16x16xf32>
    %cst_32 = arith.constant dense<0.000000e+00> : vector<1xf32>
    %48 = vector.multi_reduction <add>, %47, %cst_32 [1, 2] : vector<1x16x16xf32> to vector<1xf32>
    %49 = vector.shape_cast %48 : vector<1xf32> to vector<1x1x1xf32>
    %50 = vector.extract %49[0, 0, 0] : f32 from vector<1x1x1xf32>
    %51 = vector.broadcast %50 : f32 to vector<1x1xf32>
    %52 = arith.addf %45, %51 : vector<1x1xf32>
    %c0_33 = arith.constant 0 : index
    %c0_34 = arith.constant 0 : index
    %c0_35 = arith.constant 0 : index
    %53 = vector.load %arg8[%c0_33, %c0_34, %c0_35] : memref<1x1x1xf32, #tpu.memory_space<vmem>>, vector<1x1x1xf32>
    %54 = vector.shape_cast %53 : vector<1x1x1xf32> to vector<1x1xf32>
    %55 = vector.shape_cast %52 : vector<1x1xf32> to vector<1x1x1xf32>
    tpu.vector_store %arg8[%c0_33, %c0_34, %c0_35], %55 {strides = array<i32>} : memref<1x1x1xf32, #tpu.memory_space<vmem>>, vector<1x1x1xf32>,
    %c0_36 = arith.constant 0 : index
    %c0_37 = arith.constant 0 : index
    %c0_38 = arith.constant 0 : index
    %56 = vector.load %arg9[%c0_36, %c0_37, %c0_38] : memref<1x1x1xf32, #tpu.memory_space<vmem>>, vector<1x1x1xf32>
    %57 = vector.shape_cast %56 : vector<1x1x1xf32> to vector<1x1xf32>
    %58 = arith.mulf %8, %6 : vector<16x16xf32>
    %59 = vector.shape_cast %58 : vector<16x16xf32> to vector<1x16x16xf32>
    %cst_39 = arith.constant dense<0.000000e+00> : vector<1xf32>
    %60 = vector.multi_reduction <add>, %59, %cst_39 [1, 2] : vector<1x16x16xf32> to vector<1xf32>
    %61 = vector.shape_cast %60 : vector<1xf32> to vector<1x1x1xf32>
    %62 = vector.extract %61[0, 0, 0] : f32 from vector<1x1x1xf32>
    %63 = vector.broadcast %62 : f32 to vector<1x1xf32>
    %64 = arith.addf %57, %63 : vector<1x1xf32>
    %c0_40 = arith.constant 0 : index
    %c0_41 = arith.constant 0 : index
    %c0_42 = arith.constant 0 : index
    %65 = vector.load %arg9[%c0_40, %c0_41, %c0_42] : memref<1x1x1xf32, #tpu.memory_space<vmem>>, vector<1x1x1xf32>
    %66 = vector.shape_cast %65 : vector<1x1x1xf32> to vector<1x1xf32>
    %67 = vector.shape_cast %64 : vector<1x1xf32> to vector<1x1x1xf32>
    tpu.vector_store %arg9[%c0_40, %c0_41, %c0_42], %67 {strides = array<i32>} : memref<1x1x1xf32, #tpu.memory_space<vmem>>, vector<1x1x1xf32>,
    return
  }
  func.func @transform_0(%arg0: i32, %arg1: i32) -> (i32, i32, i32) {
    %c0_i32 = arith.constant 0 : i32
    %c0_i32_0 = arith.constant 0 : i32
    return %arg0, %arg1, %c0_i32 : i32, i32, i32
  }
  func.func @transform_1(%arg0: i32, %arg1: i32) -> (i32, i32, i32) {
    %c0_i32 = arith.constant 0 : i32
    %c0_i32_0 = arith.constant 0 : i32
    return %arg0, %arg1, %c0_i32 : i32, i32, i32
  }
  func.func @transform_2(%arg0: i32, %arg1: i32) -> (i32, i32, i32) {
    %c0_i32 = arith.constant 0 : i32
    %c0_i32_0 = arith.constant 0 : i32
    return %arg0, %arg1, %c0_i32 : i32, i32, i32
  }
  func.func @transform_3(%arg0: i32, %arg1: i32) -> (i32, i32, i32) {
    %c0_i32 = arith.constant 0 : i32
    %c0_i32_0 = arith.constant 0 : i32
    %c0_i32_1 = arith.constant 0 : i32
    return %arg0, %c0_i32, %c0_i32_0 : i32, i32, i32
  }
  func.func @transform_4(%arg0: i32, %arg1: i32) -> (i32, i32, i32) {
    %c0_i32 = arith.constant 0 : i32
    %c0_i32_0 = arith.constant 0 : i32
    %c0_i32_1 = arith.constant 0 : i32
    return %arg0, %c0_i32, %c0_i32_0 : i32, i32, i32
  }
  func.func @transform_5(%arg0: i32, %arg1: i32) -> (i32, i32, i32) {
    %c0_i32 = arith.constant 0 : i32
    %c0_i32_0 = arith.constant 0 : i32
    %c0_i32_1 = arith.constant 0 : i32
    return %arg0, %c0_i32, %c0_i32_0 : i32, i32, i32
  }
  func.func @transform_6(%arg0: i32, %arg1: i32) -> (i32, i32, i32) {
    %c0_i32 = arith.constant 0 : i32
    %c0_i32_0 = arith.constant 0 : i32
    %c0_i32_1 = arith.constant 0 : i32
    return %arg0, %c0_i32, %c0_i32_0 : i32, i32, i32
  }
  func.func @transform_7(%arg0: i32, %arg1: i32) -> (i32, i32, i32) {
    %c0_i32 = arith.constant 0 : i32
    %c0_i32_0 = arith.constant 0 : i32
    %c0_i32_1 = arith.constant 0 : i32
    return %arg0, %c0_i32, %c0_i32_0 : i32, i32, i32
  }
}

</mosaic_0001>

<llo_original>
// kernel: tpu_custom_call.1
$region0: #{tpu_custom_call.1}
  #allocation0 [shape = 'u32[]', space=smem, size = 0x4, offset = 0x4, fixed_abs, tag = 'smem constant byte address 0x4 - core index']
  #allocation1 [shape = 'u32[144,128]{1,0:T(1,128)}', space=vmem, size = 0x12000, scoped, tag = 'internal scratch']
  %s0 = inlined_call_operand.hbm [shape: f32[2,16,16], index: 0, kind: input, shape index: {}]
  %s1 = inlined_call_operand.hbm [shape: f32[2,16,16], index: 1, kind: input, shape index: {}]
  %s2 = inlined_call_operand.hbm [shape: f32[2,16,16], index: 2, kind: input, shape index: {}]
  %s3 = inlined_call_operand.vmem [shape: f32[2,1,1], index: 3, kind: output, shape index: {0}]
  %s4 = inlined_call_operand.vmem [shape: f32[2,1,1], index: 4, kind: output, shape index: {1}]
  %s5 = inlined_call_operand.vmem [shape: f32[2,1,1], index: 5, kind: output, shape index: {2}]
  %s6 = inlined_call_operand.vmem [shape: f32[2,1,1], index: 6, kind: output, shape index: {3}]
  %s7 = inlined_call_operand.vmem [shape: f32[2,1,1], index: 7, kind: output, shape index: {4}]
  %8 = xla_tuple %s3, %s4, %s5, %s6, %s7
  %s9 = sld [smem:[#allocation0]]
  $region93: #{tpu_custom_call.1} parent=0
    _
  %s11 = ssub.s32 1, %s9
  %s12 = scalar_select 0, %s11, %s9
  $region1: #{tpu_custom_call.1} parent=0
    #allocation2 [shape = 'u8[16384]{0}', space=vmem, size = 0x4000, scoped, tag = 'input window, operand 0']
    #allocation3 [shape = 's32[2]{0}', space=sflag, size = 0x8, scoped, tag = 'scoped memory for tpu_custom_call.1']
    #allocation4 [shape = 'u8[16384]{0}', space=vmem, size = 0x4000, scoped, tag = 'input window, operand 1']
    #allocation5 [shape = 's32[2]{0}', space=sflag, size = 0x8, scoped, tag = 'scoped memory for tpu_custom_call.1']
    #allocation6 [shape = 'u8[16384]{0}', space=vmem, size = 0x4000, scoped, tag = 'input window, operand 2']
    %13 = vsyncpa [#allocation3], 0
    %s14 = scalar_lea.sflag [#allocation3], 1
    %15 = vsyncpa %s14, 0
    %16 = vsyncpa [#allocation5], 0
    %s17 = scalar_lea.sflag [#allocation5], 1
    %18 = vsyncpa %s17, 0
    loop: start=0, step=1, limit=4
    $region2: #{tpu_custom_call.1} parent=1 // loop_pre_header
      _
    $region3: #{tpu_custom_call.1} parent=1 // loop_header
      %s20 = sphi 0, %s24
      %p21 = scmp.ge.s32.totalorder %s20, 4
      %s27 = sphi 0, %s39
      %s28 = sphi 0, %s35
      %s29 = sphi 0, %s27
      %s30 = sphi 0, %s28
      %s31 = sphi 0, %s29
      %s32 = sphi 0, %s30
      %s44 = sphi 0, %s46
      %s47 = sphi 0, %s44
      %s48 = sphi 0, %s47
      %s64 = sphi 0, %s48
      %s72 = sphi 0, %s74
      %s75 = sphi 0, %s72
      %s76 = sphi 0, %s75
      %s92 = sphi 0, %s76
      %s100 = sphi 0, %s102
      %s103 = sphi 0, %s100
      %s104 = sphi 0, %s103
      %s120 = sphi 0, %s104
      %s126 = sphi 0, %s128
      %s129 = sphi 0, %s126
      %s130 = sphi 0, %s129
      %s146 = sphi 0, %s130
      %s152 = sphi 0, %s154
      %s155 = sphi 0, %s152
      %s156 = sphi 0, %s155
      %s172 = sphi 0, %s156
      %s178 = sphi 0, %s180
      %s181 = sphi 0, %s178
      %s182 = sphi 0, %s181
      %s198 = sphi 0, %s182
      %s204 = sphi 0, %s206
      %s207 = sphi 0, %s204
      %s208 = sphi 0, %s207
      %s224 = sphi 0, %s208
      %s230 = sphi 0, %s232
      %s233 = sphi 0, %s230
      %s234 = sphi 0, %s233
      %s250 = sphi 0, %s234
    $region4: #{tpu_custom_call.1} parent=1 // loop_header_branch
      %23 = sbr.rel (%p21) target = $region8
    $region5: #{tpu_custom_call.1} parent=1 // loop_body
      %s25 = ssub.s32 %s20, 1
      %s26 = ssub.s32 %s20, 2
      %s33 = sadd.s32 1, %s28
      %p34 = scmp.ge.s32.totalorder %s33, 1
      %s35 = scalar_select %p34, 0, %s33
      %s36 = sadd.s32 1, %s27
      %s37 = scalar_select %p34, %s36, %s27
      %p38 = scmp.ge.s32.totalorder %s37, 2
      %s39 = scalar_select %p38, 0, %s37
      %s40 = ssub.s32 %s27, %s39
      %s41 = ssub.s32 %s28, %s35
      %s42 = sor.u32 %s40, %s41
      %p43 = scmp.eq.s32.totalorder %s42, 0
      %s45 = sadd.s32 %s44, 1
      %s46 = scalar_select %p43, %s44, %s45
      %p49 = pneg %p43
      %p50 = scmp.eq.s32.totalorder %s20, 1
      %p51 = por %p49, %p50
      %p52 = scmp.ne.s32.totalorder %s44, %s47
      %p53 = scmp.eq.s32.totalorder %s20, 0
      %p54 = por %p52, %p53
      %p55 = scmp.ne.s32.totalorder %s44, %s47
      %p56 = scmp.eq.s32.totalorder %s25, 1
      %p57 = por %p55, %p56
      %p58 = scmp.ne.s32.totalorder %s47, %s48
      %p59 = scmp.eq.s32.totalorder %s25, 0
      %p60 = por %p58, %p59
      %p61 = scmp.ne.s32.totalorder %s47, %s48
      %p62 = scmp.eq.s32.totalorder %s26, 1
      %p63 = por %p61, %p62
      %p65 = scmp.ne.s32.totalorder %s48, %s64
      %p66 = scmp.eq.s32.totalorder %s26, 0
      %p67 = por %p65, %p66
      %s68 = ssub.s32 %s27, %s39
      %s69 = ssub.s32 %s28, %s35
      %s70 = sor.u32 %s68, %s69
      %p71 = scmp.eq.s32.totalorder %s70, 0
      %s73 = sadd.s32 %s72, 1
      %s74 = scalar_select %p71, %s72, %s73
      %p77 = pneg %p71
      %p78 = scmp.eq.s32.totalorder %s20, 1
      %p79 = por %p77, %p78
      %p80 = scmp.ne.s32.totalorder %s72, %s75
      %p81 = scmp.eq.s32.totalorder %s20, 0
      %p82 = por %p80, %p81
      %p83 = scmp.ne.s32.totalorder %s72, %s75
      %p84 = scmp.eq.s32.totalorder %s25, 1
      %p85 = por %p83, %p84
      %p86 = scmp.ne.s32.totalorder %s75, %s76
      %p87 = scmp.eq.s32.totalorder %s25, 0
      %p88 = por %p86, %p87
      %p89 = scmp.ne.s32.totalorder %s75, %s76
      %p90 = scmp.eq.s32.totalorder %s26, 1
      %p91 = por %p89, %p90
      %p93 = scmp.ne.s32.totalorder %s76, %s92
      %p94 = scmp.eq.s32.totalorder %s26, 0
      %p95 = por %p93, %p94
      %s96 = ssub.s32 %s27, %s39
      %s97 = ssub.s32 %s28, %s35
      %s98 = sor.u32 %s96, %s97
      %p99 = scmp.eq.s32.totalorder %s98, 0
      %s101 = sadd.s32 %s100, 1
      %s102 = scalar_select %p99, %s100, %s101
      %p105 = pneg %p99
      %p106 = scmp.eq.s32.totalorder %s20, 1
      %p107 = por %p105, %p106
      %p108 = scmp.ne.s32.totalorder %s100, %s103
      %p109 = scmp.eq.s32.totalorder %s20, 0
      %p110 = por %p108, %p109
      %p111 = scmp.ne.s32.totalorder %s100, %s103
      %p112 = scmp.eq.s32.totalorder %s25, 1
      %p113 = por %p111, %p112
      %p114 = scmp.ne.s32.totalorder %s103, %s104
      %p115 = scmp.eq.s32.totalorder %s25, 0
      %p116 = por %p114, %p115
      %p117 = scmp.ne.s32.totalorder %s103, %s104
      %p118 = scmp.eq.s32.totalorder %s26, 1
      %p119 = por %p117, %p118
      %p121 = scmp.ne.s32.totalorder %s104, %s120
      %p122 = scmp.eq.s32.totalorder %s26, 0
      %p123 = por %p121, %p122
      %s124 = ssub.s32 %s27, %s39
      %p125 = scmp.eq.s32.totalorder %s124, 0
      %s127 = sadd.s32 %s126, 1
      %s128 = scalar_select %p125, %s126, %s127
      %p131 = pneg %p125
      %p132 = scmp.eq.s32.totalorder %s20, 1
      %p133 = por %p131, %p132
      %p134 = scmp.ne.s32.totalorder %s126, %s129
      %p135 = scmp.eq.s32.totalorder %s20, 0
      %p136 = por %p134, %p135
      %p137 = scmp.ne.s32.totalorder %s126, %s129
      %p138 = scmp.eq.s32.totalorder %s25, 1
      %p139 = por %p137, %p138
      %p140 = scmp.ne.s32.totalorder %s129, %s130
      %p141 = scmp.eq.s32.totalorder %s25, 0
      %p142 = por %p140, %p141
      %p143 = scmp.ne.s32.totalorder %s129, %s130
      %p144 = scmp.eq.s32.totalorder %s26, 1
      %p145 = por %p143, %p144
      %p147 = scmp.ne.s32.totalorder %s130, %s146
      %p148 = scmp.eq.s32.totalorder %s26, 0
      %p149 = por %p147, %p148
      %s150 = ssub.s32 %s27, %s39
      %p151 = scmp.eq.s32.totalorder %s150, 0
      %s153 = sadd.s32 %s152, 1
      %s154 = scalar_select %p151, %s152, %s153
      %p157 = pneg %p151
      %p158 = scmp.eq.s32.totalorder %s20, 1
      %p159 = por %p157, %p158
      %p160 = scmp.ne.s32.totalorder %s152, %s155
      %p161 = scmp.eq.s32.totalorder %s20, 0
      %p162 = por %p160, %p161
      %p163 = scmp.ne.s32.totalorder %s152, %s155
      %p164 = scmp.eq.s32.totalorder %s25, 1
      %p165 = por %p163, %p164
      %p166 = scmp.ne.s32.totalorder %s155, %s156
      %p167 = scmp.eq.s32.totalorder %s25, 0
      %p168 = por %p166, %p167
      %p169 = scmp.ne.s32.totalorder %s155, %s156
      %p170 = scmp.eq.s32.totalorder %s26, 1
      %p171 = por %p169, %p170
      %p173 = scmp.ne.s32.totalorder %s156, %s172
      %p174 = scmp.eq.s32.totalorder %s26, 0
      %p175 = por %p173, %p174
      %s176 = ssub.s32 %s27, %s39
      %p177 = scmp.eq.s32.totalorder %s176, 0
      %s179 = sadd.s32 %s178, 1
      %s180 = scalar_select %p177, %s178, %s179
      %p183 = pneg %p177
      %p184 = scmp.eq.s32.totalorder %s20, 1
      %p185 = por %p183, %p184
      %p186 = scmp.ne.s32.totalorder %s178, %s181
      %p187 = scmp.eq.s32.totalorder %s20, 0
      %p188 = por %p186, %p187
      %p189 = scmp.ne.s32.totalorder %s178, %s181
      %p190 = scmp.eq.s32.totalorder %s25, 1
      %p191 = por %p189, %p190
      %p192 = scmp.ne.s32.totalorder %s181, %s182
      %p193 = scmp.eq.s32.totalorder %s25, 0
      %p194 = por %p192, %p193
      %p195 = scmp.ne.s32.totalorder %s181, %s182
      %p196 = scmp.eq.s32.totalorder %s26, 1
      %p197 = por %p195, %p196
      %p199 = scmp.ne.s32.totalorder %s182, %s198
      %p200 = scmp.eq.s32.totalorder %s26, 0
      %p201 = por %p199, %p200
      %s202 = ssub.s32 %s27, %s39
      %p203 = scmp.eq.s32.totalorder %s202, 0
      %s205 = sadd.s32 %s204, 1
      %s206 = scalar_select %p203, %s204, %s205
      %p209 = pneg %p203
      %p210 = scmp.eq.s32.totalorder %s20, 1
      %p211 = por %p209, %p210
      %p212 = scmp.ne.s32.totalorder %s204, %s207
      %p213 = scmp.eq.s32.totalorder %s20, 0
      %p214 = por %p212, %p213
      %p215 = scmp.ne.s32.totalorder %s204, %s207
      %p216 = scmp.eq.s32.totalorder %s25, 1
      %p217 = por %p215, %p216
      %p218 = scmp.ne.s32.totalorder %s207, %s208
      %p219 = scmp.eq.s32.totalorder %s25, 0
      %p220 = por %p218, %p219
      %p221 = scmp.ne.s32.totalorder %s207, %s208
      %p222 = scmp.eq.s32.totalorder %s26, 1
      %p223 = por %p221, %p222
      %p225 = scmp.ne.s32.totalorder %s208, %s224
      %p226 = scmp.eq.s32.totalorder %s26, 0
      %p227 = por %p225, %p226
      %s228 = ssub.s32 %s27, %s39
      %p229 = scmp.eq.s32.totalorder %s228, 0
      %s231 = sadd.s32 %s230, 1
      %s232 = scalar_select %p229, %s230, %s231
      %p235 = pneg %p229
      %p236 = scmp.eq.s32.totalorder %s20, 1
      %p237 = por %p235, %p236
      %p238 = scmp.ne.s32.totalorder %s230, %s233
      %p239 = scmp.eq.s32.totalorder %s20, 0
      %p240 = por %p238, %p239
      %p241 = scmp.ne.s32.totalorder %s230, %s233
      %p242 = scmp.eq.s32.totalorder %s25, 1
      %p243 = por %p241, %p242
      %p244 = scmp.ne.s32.totalorder %s233, %s234
      %p245 = scmp.eq.s32.totalorder %s25, 0
      %p246 = por %p244, %p245
      %p247 = scmp.ne.s32.totalorder %s233, %s234
      %p248 = scmp.eq.s32.totalorder %s26, 1
      %p249 = por %p247, %p248
      %p251 = scmp.ne.s32.totalorder %s234, %s250
      %p252 = scmp.eq.s32.totalorder %s26, 0
      %p253 = por %p251, %p252
      %p254 = scmp.le.s32.totalorder 1, %s20
      %p255 = scmp.lt.s32.totalorder %s20, 3
      %p256 = pnand %p254, %p255
      %p257 = pneg %p256
      // Predicated region
      $region9: #{tpu_custom_call.1} parent=5 // pred_check
        _
      $region10: #{tpu_custom_call.1} parent=5 // pred_check_branch
        %259 = sbr.rel (%p256) target = $region12
      $region11: #{tpu_custom_call.1} parent=5 // pred_region
        %s260 = ssub.s32 %s20, 1
      $region12: #{tpu_custom_call.1} parent=5 // pred_fallthru
        _
      %p261 = scmp.lt.s32.totalorder %s20, 2
      // Predicated region
      $region13: #{tpu_custom_call.1} parent=5 // pred_check
        %p262 = pneg %p261
      $region14: #{tpu_custom_call.1} parent=5 // pred_check_branch
        %264 = sbr.rel (%p262) target = $region16
      $region15: #{tpu_custom_call.1} parent=5 // pred_region
        // Predicated region
        $region17: #{tpu_custom_call.1} parent=15 // pred_check
          %p265 = pneg %p54
        $region18: #{tpu_custom_call.1} parent=15 // pred_check_branch
          %267 = sbr.rel (%p265) target = $region20
        $region19: #{tpu_custom_call.1} parent=15 // pred_region
          %s268 = sand.u32 %s44, 1
          %s269 = scalar_lea.sflag [#allocation3], %s268
          %s270 = sand.u32 %s44, 1
          %s271 = smul.addr %s270, 16
          %s272 = scalar_lea.vmem [#allocation2], %s271
          %s273 = smul.u32 2, %s28
          %s275 = ssub.s32 256, 256
          %276 = vsyncadd %s269, %s275
          %s277 = smul.addr %s27, 2
          %s278 = sadd.s32 %s273, %s277
          %s279 = smul.addr %s278, 128
          %s280 = scalar_lea.hbm %s0, %s279
          %s281 = sshll.u32 %s272, 4
          %s282 = int_to_ptr.vmem [resolvable:$true] %s281
          %287 = dma.hbm_to_vmem [thread:$0]  %s280, 256, %s282, %s269, 128, 128, 8
        $region20: #{tpu_custom_call.1} parent=15 // pred_fallthru
          _
        // Predicated region
        $region21: #{tpu_custom_call.1} parent=15 // pred_check
          %p288 = pneg %p82
        $region22: #{tpu_custom_call.1} parent=15 // pred_check_branch
          %290 = sbr.rel (%p288) target = $region24
        $region23: #{tpu_custom_call.1} parent=15 // pred_region
          %s291 = sand.u32 %s20, 1
          %s292 = scalar_lea.sflag [#allocation5], %s291
          %s293 = sand.u32 %s72, 1
          %s294 = smul.addr %s293, 16
          %s295 = scalar_lea.vmem [#allocation4], %s294
          %s296 = smul.u32 2, %s28
          %s298 = ssub.s32 256, 256
          %299 = vsyncadd %s292, %s298
          %s300 = smul.addr %s27, 2
          %s301 = sadd.s32 %s296, %s300
          %s302 = smul.addr %s301, 128
          %s303 = scalar_lea.hbm %s1, %s302
          %s304 = sshll.u32 %s295, 4
          %s305 = int_to_ptr.vmem [resolvable:$true] %s304
          %310 = dma.hbm_to_vmem [thread:$0]  %s303, 256, %s305, %s292, 128, 128, 8
        $region24: #{tpu_custom_call.1} parent=15 // pred_fallthru
          _
        // Predicated region
        $region25: #{tpu_custom_call.1} parent=15 // pred_check
          %p311 = pneg %p110
        $region26: #{tpu_custom_call.1} parent=15 // pred_check_branch
          %313 = sbr.rel (%p311) target = $region28
        $region27: #{tpu_custom_call.1} parent=15 // pred_region
          %s314 = sand.u32 %s20, 1
          %s315 = scalar_lea.sflag [#allocation5], %s314
          %s316 = sand.u32 %s100, 1
          %s317 = smul.addr %s316, 16
          %s318 = scalar_lea.vmem [#allocation6], %s317
          %s319 = smul.u32 2, %s28
          %s321 = ssub.s32 256, 256
          %322 = vsyncadd %s315, %s321
          %s323 = smul.addr %s27, 2
          %s324 = sadd.s32 %s319, %s323
          %s325 = smul.addr %s324, 128
          %s326 = scalar_lea.hbm %s2, %s325
          %s327 = sshll.u32 %s318, 4
          %s328 = int_to_ptr.vmem [resolvable:$true] %s327
          %333 = dma.hbm_to_vmem [thread:$0]  %s326, 256, %s328, %s315, 128, 128, 8
        $region28: #{tpu_custom_call.1} parent=15 // pred_fallthru
          _
      $region16: #{tpu_custom_call.1} parent=5 // pred_fallthru
        _
      %p334 = scmp.le.s32.totalorder 1, %s20
      %p335 = scmp.lt.s32.totalorder %s20, 3
      %p336 = pnand %p334, %p335
      %p337 = pneg %p336
      // Predicated region
      $region29: #{tpu_custom_call.1} parent=5 // pred_check
        _
      $region30: #{tpu_custom_call.1} parent=5 // pred_check_branch
        %339 = sbr.rel (%p336) target = $region32
      $region31: #{tpu_custom_call.1} parent=5 // pred_region
        %s340 = ssub.s32 %s20, 1
        %s341 = sand.u32 %s47, 1
        %s342 = scalar_lea.sflag [#allocation3], %s341
        %s343 = sand.u32 %s47, 1
        %s344 = smul.addr %s343, 16
        %s345 = scalar_lea.vmem [#allocation2], %s344
        // Predicated region
        $region33: #{tpu_custom_call.1} parent=31 // pred_check
          %p346 = pneg %p60
        $region34: #{tpu_custom_call.1} parent=31 // pred_check_branch
          %348 = sbr.rel (%p346) target = $region36
        $region35: #{tpu_custom_call.1} parent=31 // pred_region
          %349 = dma.done %s342, 256
        $region36: #{tpu_custom_call.1} parent=31 // pred_fallthru
          _
        %s350 = sand.u32 %s25, 1
        %s351 = scalar_lea.sflag [#allocation5], %s350
        %s352 = sand.u32 %s75, 1
        %s353 = smul.addr %s352, 16
        %s354 = scalar_lea.vmem [#allocation4], %s353
        // Predicated region
        $region37: #{tpu_custom_call.1} parent=31 // pred_check
          %p355 = pneg %p88
        $region38: #{tpu_custom_call.1} parent=31 // pred_check_branch
          %357 = sbr.rel (%p355) target = $region40
        $region39: #{tpu_custom_call.1} parent=31 // pred_region
          %358 = dma.done %s351, 256
        $region40: #{tpu_custom_call.1} parent=31 // pred_fallthru
          _
        %s359 = sand.u32 %s25, 1
        %s360 = scalar_lea.sflag [#allocation5], %s359
        %s361 = sand.u32 %s103, 1
        %s362 = smul.addr %s361, 16
        %s363 = scalar_lea.vmem [#allocation6], %s362
        // Predicated region
        $region41: #{tpu_custom_call.1} parent=31 // pred_check
          %p364 = pneg %p116
        $region42: #{tpu_custom_call.1} parent=31 // pred_check_branch
          %366 = sbr.rel (%p364) target = $region44
        $region43: #{tpu_custom_call.1} parent=31 // pred_region
          %367 = dma.done %s360, 256
        $region44: #{tpu_custom_call.1} parent=31 // pred_fallthru
          _
        %s368 = sand.u32 %s47, 1
        %s369 = scalar_lea.sflag [#allocation3], %s368
        %s370 = sand.u32 %s47, 1
        %s371 = smul.addr %s370, 16
        %s372 = scalar_lea.vmem [#allocation2], %s371
        %p373 = pneg %p60
        %p374 = pneg %p57
        %s375 = sand.u32 %s25, 1
        %s376 = scalar_lea.sflag [#allocation5], %s375
        %s377 = sand.u32 %s75, 1
        %s378 = smul.addr %s377, 16
        %s379 = scalar_lea.vmem [#allocation4], %s378
        %p380 = pneg %p88
        %p381 = pneg %p85
        %s382 = sand.u32 %s25, 1
        %s383 = scalar_lea.sflag [#allocation5], %s382
        %s384 = sand.u32 %s103, 1
        %s385 = smul.addr %s384, 16
        %s386 = scalar_lea.vmem [#allocation6], %s385
        %p387 = pneg %p116
        %p388 = pneg %p113
        %p389 = pneg %p142
        %p390 = pneg %p139
        %p391 = scmp.lt.s32.totalorder %s29, 1
        %s392 = scalar_select %p391, %s29, 1
        %s393 = scalar_lea.vmem %s3, %s392
        %p394 = pneg %p168
        %p395 = pneg %p165
        %p396 = scmp.lt.s32.totalorder %s29, 1
        %s397 = scalar_select %p396, %s29, 1
        %s398 = scalar_lea.vmem %s4, %s397
        %p399 = pneg %p194
        %p400 = pneg %p191
        %p401 = scmp.lt.s32.totalorder %s29, 1
        %s402 = scalar_select %p401, %s29, 1
        %s403 = scalar_lea.vmem %s5, %s402
        %p404 = pneg %p220
        %p405 = pneg %p217
        %p406 = scmp.lt.s32.totalorder %s29, 1
        %s407 = scalar_select %p406, %s29, 1
        %s408 = scalar_lea.vmem %s6, %s407
        %p409 = pneg %p246
        %p410 = pneg %p243
        %p411 = scmp.lt.s32.totalorder %s29, 1
        %s412 = scalar_select %p411, %s29, 1
        %s413 = scalar_lea.vmem %s7, %s412
        %s414 = smul.u32 2, %s30
        %s415 = smul.u32 2, %s30
        %s416 = smul.u32 2, %s30
        %p417 = scmp.lt.s32.totalorder %s29, 1
        %s418 = scalar_select %p417, %s29, 1
        %s419 = scalar_lea.vmem %s3, %s418
        %p420 = scmp.lt.s32.totalorder %s29, 1
        %s421 = scalar_select %p420, %s29, 1
        %s422 = scalar_lea.vmem %s4, %s421
        %p423 = scmp.lt.s32.totalorder %s29, 1
        %s424 = scalar_select %p423, %s29, 1
        %s425 = scalar_lea.vmem %s5, %s424
        %p426 = scmp.lt.s32.totalorder %s29, 1
        %s427 = scalar_select %p426, %s29, 1
        %s428 = scalar_lea.vmem %s6, %s427
        %p429 = scmp.lt.s32.totalorder %s29, 1
        %s430 = scalar_select %p429, %s29, 1
        %s431 = scalar_lea.vmem %s7, %s430
        %p432 = scmp.eq.s32.totalorder %s30, 0
        // Predicated region
        $region45: #{tpu_custom_call.1} parent=31 // pred_check
          %p433 = pneg %p432
        $region46: #{tpu_custom_call.1} parent=31 // pred_check_branch
          %435 = sbr.rel (%p433) target = $region48
        $region47: #{tpu_custom_call.1} parent=31 // pred_region
          %vm436 = vcmask 0
          %437 = vst.msk [vmem:[%s419] sm:$0x1] %vm436, 0.0
          %438 = vst.msk [vmem:[%s422] sm:$0x1] %vm436, 0.0
          %439 = vst.msk [vmem:[%s425] sm:$0x1] %vm436, 0.0
          %440 = vst.msk [vmem:[%s428] sm:$0x1] %vm436, 0.0
          %441 = vst.msk [vmem:[%s431] sm:$0x1] %vm436, 0.0
        $region48: #{tpu_custom_call.1} parent=31 // pred_fallthru
          _
        %v442 = vld [vmem:[%s345] sm:$0xff]
        %v443 = vld [vmem:[%s345 + $0x8] sm:$0xff]
        %v444 = vld [vmem:[%s354] sm:$0xff]
        %v445 = vld [vmem:[%s354 + $0x8] sm:$0xff]
        %v446 = vld [vmem:[%s363] sm:$0xff]
        %v447 = vld [vmem:[%s363 + $0x8] sm:$0xff]
        %v448 = vmul.f32 %v446, %v442
        %v449 = vmul.f32 %v447, %v443
        %v450 = vld [vmem:[%s419] sm:$0x1]
        %v451 = vmul.f32 %v448, %v442
        %v452 = vmul.f32 %v449, %v443
        %vm453 = vcmask 130048
        %v454 = vsel %vm453, %v451, 0.0
        %v455 = vsel %vm453, %v452, 0.0
        %v456 = vadd.f32 %v454, %v455
        %457 = vadd.xlane.f32.xlu0 %v456
        %v458 = vpop.xlane.xlu0 %457
        %v459 = vrot.slane %v458, 4
        %v460 = vadd.f32 %v458, %v459
        %v461 = vrot.slane %v460, 2
        %v462 = vadd.f32 %v460, %v461
        %v463 = vrot.slane %v462, 1
        %v464 = vadd.f32 %v462, %v463
        %s465 = vtos %v464
        %v466 = vstv %s465
        %v467 = vadd.f32 %v450, %v466
        %vm468 = vcmask 0
        %469 = vst.msk [vmem:[%s419] sm:$0x1] %vm468, %v467
        %v470 = vld [vmem:[%s422] sm:$0x1]
        %v471 = vsel %vm453, %v448, 0.0
        %v472 = vsel %vm453, %v449, 0.0
        %v473 = vadd.f32 %v471, %v472
        %474 = vadd.xlane.f32.xlu0 %v473
        %v475 = vpop.xlane.xlu0 %474
        %v476 = vrot.slane %v475, 4
        %v477 = vadd.f32 %v475, %v476
        %v478 = vrot.slane %v477, 2
        %v479 = vadd.f32 %v477, %v478
        %v480 = vrot.slane %v479, 1
        %v481 = vadd.f32 %v479, %v480
        %s482 = vtos %v481
        %v483 = vstv %s482
        %v484 = vadd.f32 %v470, %v483
        %485 = vst.msk [vmem:[%s422] sm:$0x1] %vm468, %v484
        %v486 = vld [vmem:[%s425] sm:$0x1]
        %v487 = vsel %vm453, %v446, 0.0
        %v488 = vsel %vm453, %v447, 0.0
        %v489 = vadd.f32 %v487, %v488
        %490 = vadd.xlane.f32.xlu0 %v489
        %v491 = vpop.xlane.xlu0 %490
        %v492 = vrot.slane %v491, 4
        %v493 = vadd.f32 %v491, %v492
        %v494 = vrot.slane %v493, 2
        %v495 = vadd.f32 %v493, %v494
        %v496 = vrot.slane %v495, 1
        %v497 = vadd.f32 %v495, %v496
        %s498 = vtos %v497
        %v499 = vstv %s498
        %v500 = vadd.f32 %v486, %v499
        %501 = vst.msk [vmem:[%s425] sm:$0x1] %vm468, %v500
        %v502 = vld [vmem:[%s428] sm:$0x1]
        %v503 = vmul.f32 %v448, %v444
        %v504 = vmul.f32 %v449, %v445
        %v505 = vsel %vm453, %v503, 0.0
        %v506 = vsel %vm453, %v504, 0.0
        %v507 = vadd.f32 %v505, %v506
        %508 = vadd.xlane.f32.xlu0 %v507
        %v509 = vpop.xlane.xlu0 %508
        %v510 = vrot.slane %v509, 4
        %v511 = vadd.f32 %v509, %v510
        %v512 = vrot.slane %v511, 2
        %v513 = vadd.f32 %v511, %v512
        %v514 = vrot.slane %v513, 1
        %v515 = vadd.f32 %v513, %v514
        %s516 = vtos %v515
        %v517 = vstv %s516
        %v518 = vadd.f32 %v502, %v517
        %519 = vst.msk [vmem:[%s428] sm:$0x1] %vm468, %v518
        %v520 = vld [vmem:[%s431] sm:$0x1]
        %v521 = vmul.f32 %v446, %v444
        %v522 = vmul.f32 %v447, %v445
        %v523 = vsel %vm453, %v521, 0.0
        %v524 = vsel %vm453, %v522, 0.0
        %v525 = vadd.f32 %v523, %v524
        %526 = vadd.xlane.f32.xlu0 %v525
        %v527 = vpop.xlane.xlu0 %526
        %v528 = vrot.slane %v527, 4
        %v529 = vadd.f32 %v527, %v528
        %v530 = vrot.slane %v529, 2
        %v531 = vadd.f32 %v529, %v530
        %v532 = vrot.slane %v531, 1
        %v533 = vadd.f32 %v531, %v532
        %s534 = vtos %v533
        %v535 = vstv %s534
        %v536 = vadd.f32 %v520, %v535
        %537 = vst.msk [vmem:[%s431] sm:$0x1] %vm468, %v536
        %p538 = scmp.lt.s32.totalorder %s29, 1
        %s539 = scalar_select %p538, %s29, 1
        %s540 = scalar_lea.vmem %s3, %s539
        %p541 = scmp.lt.s32.totalorder %s29, 1
        %s542 = scalar_select %p541, %s29, 1
        %s543 = scalar_lea.vmem %s4, %s542
        %p544 = scmp.lt.s32.totalorder %s29, 1
        %s545 = scalar_select %p544, %s29, 1
        %s546 = scalar_lea.vmem %s5, %s545
        %p547 = scmp.lt.s32.totalorder %s29, 1
        %s548 = scalar_select %p547, %s29, 1
        %s549 = scalar_lea.vmem %s6, %s548
        %p550 = scmp.lt.s32.totalorder %s29, 1
        %s551 = scalar_select %p550, %s29, 1
        %s552 = scalar_lea.vmem %s7, %s551
        // Predicated region
        $region49: #{tpu_custom_call.1} parent=31 // pred_check
          %p553 = pneg %p139
        $region50: #{tpu_custom_call.1} parent=31 // pred_check_branch
          %555 = sbr.rel (%p553) target = $region52
        $region51: #{tpu_custom_call.1} parent=31 // pred_region
          _
        $region52: #{tpu_custom_call.1} parent=31 // pred_fallthru
          _
        // Predicated region
        $region53: #{tpu_custom_call.1} parent=31 // pred_check
          %p556 = pneg %p165
        $region54: #{tpu_custom_call.1} parent=31 // pred_check_branch
          %558 = sbr.rel (%p556) target = $region56
        $region55: #{tpu_custom_call.1} parent=31 // pred_region
          _
        $region56: #{tpu_custom_call.1} parent=31 // pred_fallthru
          _
        // Predicated region
        $region57: #{tpu_custom_call.1} parent=31 // pred_check
          %p559 = pneg %p191
        $region58: #{tpu_custom_call.1} parent=31 // pred_check_branch
          %561 = sbr.rel (%p559) target = $region60
        $region59: #{tpu_custom_call.1} parent=31 // pred_region
          _
        $region60: #{tpu_custom_call.1} parent=31 // pred_fallthru
          _
        // Predicated region
        $region61: #{tpu_custom_call.1} parent=31 // pred_check
          %p562 = pneg %p217
        $region62: #{tpu_custom_call.1} parent=31 // pred_check_branch
          %564 = sbr.rel (%p562) target = $region64
        $region63: #{tpu_custom_call.1} parent=31 // pred_region
          _
        $region64: #{tpu_custom_call.1} parent=31 // pred_fallthru
          _
        // Predicated region
        $region65: #{tpu_custom_call.1} parent=31 // pred_check
          %p565 = pneg %p243
        $region66: #{tpu_custom_call.1} parent=31 // pred_check_branch
          %567 = sbr.rel (%p565) target = $region68
        $region67: #{tpu_custom_call.1} parent=31 // pred_region
          _
        $region68: #{tpu_custom_call.1} parent=31 // pred_fallthru
          _
      $region32: #{tpu_custom_call.1} parent=5 // pred_fallthru
        _
      %p568 = scmp.le.s32.totalorder 2, %s20
      // Predicated region
      $region69: #{tpu_custom_call.1} parent=5 // pred_check
        %p569 = pneg %p568
      $region70: #{tpu_custom_call.1} parent=5 // pred_check_branch
        %571 = sbr.rel (%p569) target = $region72
      $region71: #{tpu_custom_call.1} parent=5 // pred_region
        %s572 = ssub.s32 %s20, 2
        // Predicated region
        $region73: #{tpu_custom_call.1} parent=71 // pred_check
          %p573 = pneg %p145
        $region74: #{tpu_custom_call.1} parent=71 // pred_check_branch
          %575 = sbr.rel (%p573) target = $region76
        $region75: #{tpu_custom_call.1} parent=71 // pred_region
          %p576 = scmp.lt.s32.totalorder %s31, 1
          %s577 = scalar_select %p576, %s31, 1
          %s578 = scalar_lea.vmem %s3, %s577
        $region76: #{tpu_custom_call.1} parent=71 // pred_fallthru
          _
        // Predicated region
        $region77: #{tpu_custom_call.1} parent=71 // pred_check
          %p579 = pneg %p171
        $region78: #{tpu_custom_call.1} parent=71 // pred_check_branch
          %581 = sbr.rel (%p579) target = $region80
        $region79: #{tpu_custom_call.1} parent=71 // pred_region
          %p582 = scmp.lt.s32.totalorder %s31, 1
          %s583 = scalar_select %p582, %s31, 1
          %s584 = scalar_lea.vmem %s4, %s583
        $region80: #{tpu_custom_call.1} parent=71 // pred_fallthru
          _
        // Predicated region
        $region81: #{tpu_custom_call.1} parent=71 // pred_check
          %p585 = pneg %p197
        $region82: #{tpu_custom_call.1} parent=71 // pred_check_branch
          %587 = sbr.rel (%p585) target = $region84
        $region83: #{tpu_custom_call.1} parent=71 // pred_region
          %p588 = scmp.lt.s32.totalorder %s31, 1
          %s589 = scalar_select %p588, %s31, 1
          %s590 = scalar_lea.vmem %s5, %s589
        $region84: #{tpu_custom_call.1} parent=71 // pred_fallthru
          _
        // Predicated region
        $region85: #{tpu_custom_call.1} parent=71 // pred_check
          %p591 = pneg %p223
        $region86: #{tpu_custom_call.1} parent=71 // pred_check_branch
          %593 = sbr.rel (%p591) target = $region88
        $region87: #{tpu_custom_call.1} parent=71 // pred_region
          %p594 = scmp.lt.s32.totalorder %s31, 1
          %s595 = scalar_select %p594, %s31, 1
          %s596 = scalar_lea.vmem %s6, %s595
        $region88: #{tpu_custom_call.1} parent=71 // pred_fallthru
          _
        // Predicated region
        $region89: #{tpu_custom_call.1} parent=71 // pred_check
          %p597 = pneg %p249
        $region90: #{tpu_custom_call.1} parent=71 // pred_check_branch
          %599 = sbr.rel (%p597) target = $region92
        $region91: #{tpu_custom_call.1} parent=71 // pred_region
          %p600 = scmp.lt.s32.totalorder %s31, 1
          %s601 = scalar_select %p600, %s31, 1
          %s602 = scalar_lea.vmem %s7, %s601
        $region92: #{tpu_custom_call.1} parent=71 // pred_fallthru
          _
      $region72: #{tpu_custom_call.1} parent=5 // pred_fallthru
        _
    $region6: #{tpu_custom_call.1} parent=1 // loop_footer
      %s24 = sadd.s32 1, %s20
    $region7: #{tpu_custom_call.1} parent=1 // loop_footer_branch
      %19 = sbr.rel target = $region3
    $region8: #{tpu_custom_call.1} parent=1 // loop_exit
      _
    %603 = vsyncpa [#allocation3], 1
    %s604 = scalar_lea.sflag [#allocation3], 1
    %605 = vsyncpa %s604, 1
    %606 = vsyncpa [#allocation5], 1
    %s607 = scalar_lea.sflag [#allocation5], 1
    %608 = vsyncpa %s607, 1

</llo_original>
